<compile_context>
chip_gen: v6e
topology: v6e:2x2x1
jax: 0.10.0
libtpu: 0.0.40
codegen_flags: <defaults>
</compile_context>

<pallas_src>
import functools

import jax
import jax.numpy as jnp
from jax.experimental import pallas as pl
from jax.experimental.pallas import tpu as pltpu


def _round_up(a, b):
    return (a + b - 1) // b * b


def _sae_kernel(x_ref, we_ref, be_ref, wd_ref, sparse_ref, recon_ref, *, k):
    # Encoder: (TM, Dp) @ (Dp, Hp) + (1, Hp) -> ReLU.  Operands stay in their
    # native dtype; accumulation is f32 on the MXU.
    feats = jnp.dot(x_ref[...], we_ref[...], preferred_element_type=jnp.float32)
    feats = jnp.maximum(feats + be_ref[...].astype(jnp.float32), 0.0)

    # Exact k-th-largest value per row via binary search on the f32 bit
    # pattern.  Post-ReLU values are >= 0, so f32 ordering == int32 ordering
    # of the raw bits.  31 compare+count passes, independent of k, no unroll.
    feats_bits = pltpu.bitcast(feats, jnp.int32)
    tm = feats.shape[0]
    lo = jnp.zeros((tm, 1), jnp.int32)                  # count(bits >= lo) >= k always
    hi = jnp.full((tm, 1), 0x7F7FFFFF, jnp.int32)       # max finite f32 bits

    def _search(_, carry):
        lo, hi = carry
        mid = lo + jnp.right_shift(hi - lo + 1, 1)
        cnt = jnp.sum((feats_bits >= mid).astype(jnp.float32),
                      axis=-1, keepdims=True)
        take = cnt >= k
        return jnp.where(take, mid, lo), jnp.where(take, hi, mid - 1)

    lo, _ = jax.lax.fori_loop(0, 31, _search, (lo, hi))

    # Threshold mask.  NOTE: if several features tie exactly at the k-th value
    # (measure zero for continuous inputs) all of them are kept, whereas
    # torch.topk keeps an arbitrary subset of exactly k.  Zero-valued ties
    # contribute 0 either way, so the output tensor matches the reference.
    sparse = jnp.where(feats_bits >= lo, feats, 0.0)

    # Decoder (no bias): (TM, Hp) @ (Hp, Dp), f32 accumulation.
    recon = jnp.dot(sparse.astype(wd_ref.dtype), wd_ref[...],
                    preferred_element_type=jnp.float32)

    sparse_ref[...] = sparse.astype(sparse_ref.dtype)
    recon_ref[...] = recon.astype(recon_ref.dtype)


def sparse_autoencoder_forward(x, w_enc, b_enc, w_dec, *, k, row_tile=256):
    """x: (B, S, D). Returns (sparse_features (B,S,H), reconstruction (B,S,D))."""
    B, S, D = x.shape
    Dw, H = w_enc.shape
    assert Dw == D and w_dec.shape == (H, D)
    assert 1 <= k <= H
    assert row_tile % 8 == 0

    N = B * S
    tm = min(row_tile, _round_up(N, 8))     # don't over-tile tiny inputs
    Np = _round_up(N, tm)
    Dp = _round_up(D, 128)                  # lane-dense blocks / MXU width
    Hp = _round_up(H, 128)
    out_dtype = x.dtype

    # Zero padding is exact: padded x columns hit zero We rows, padded H
    # columns get zero weight+bias (-> zero features), padded rows are sliced.
    x_p = jnp.pad(x.reshape(N, D), ((0, Np - N), (0, Dp - D)))
    we_p = jnp.pad(w_enc, ((0, Dp - D), (0, Hp - H)))
    be_p = jnp.pad(b_enc.reshape(1, H), ((0, 0), (0, Hp - H)))
    wd_p = jnp.pad(w_dec, ((0, Hp - H), (0, Dp - D)))

    kernel = functools.partial(_sae_kernel, k=k)

    # TODO(synk): for very large hidden dims (e.g. H=24576 on v7x's 64 MiB
    # VMEM) add an H grid axis with (Dp, TH)/(TH, Dp) weight blocks, a VMEM
    # f32 recon accumulator over that axis and a streaming/two-pass threshold,
    # plus pipeline_mode=pl.Buffered(1) on the constant weight specs.
    sparse_p, recon_p = pl.pallas_call(
        kernel,
        out_shape=(
            jax.ShapeDtypeStruct((Np, Hp), out_dtype),
            jax.ShapeDtypeStruct((Np, Dp), out_dtype),
        ),
        grid_spec=pltpu.PrefetchScalarGridSpec(
            num_scalar_prefetch=0,
            grid=(Np // tm,),
            in_specs=[
                pl.BlockSpec((tm, Dp), lambda i: (i, 0)),   # x rows
                pl.BlockSpec((Dp, Hp), lambda i: (0, 0)),   # encoder weight
                pl.BlockSpec((1, Hp), lambda i: (0, 0)),    # encoder bias
                pl.BlockSpec((Hp, Dp), lambda i: (0, 0)),   # decoder weight
            ],
            out_specs=[
                pl.BlockSpec((tm, Hp), lambda i: (i, 0)),
                pl.BlockSpec((tm, Dp), lambda i: (i, 0)),
            ],
        ),
        compiler_params=pltpu.CompilerParams(
            dimension_semantics=("parallel",),
            vmem_limit_bytes=48 * 1024 * 1024,
        ),
    )(x_p, we_p, be_p, wd_p)

    sparse = sparse_p[:N, :H].reshape(B, S, H)
    recon = recon_p[:N, :D].reshape(B, S, D)
    return sparse, recon


def _reference_forward(x, w_enc, b_enc, w_dec, k):
    """Pure-JAX reference matching the PyTorch module semantics."""
    B, S, D = x.shape
    H = w_enc.shape[1]
    feats = jax.nn.relu(x.reshape(-1, D) @ w_enc + b_enc)          # (N, H)
    vals, idx = jax.lax.top_k(feats, k)
    sparse = jnp.zeros_like(feats)
    sparse = jax.vmap(lambda s, i, v: s.at[i].set(v))(sparse, idx, vals)
    recon = sparse @ w_dec
    return sparse.reshape(B, S, H), recon.reshape(B, S, D)


if __name__ == "__main__":
    # Small synthetic shapes consistent with the module's forward:
    # x: (batch, seq, input_dim); hidden_dim features; top-k sparsity.
    batch, seq, input_dim, hidden_dim, k = 2, 8, 32, 64, 8

    key = jax.random.PRNGKey(0)
    kx, kw1, kb1, kw2 = jax.random.split(key, 4)

    x = jax.random.normal(kx, (batch, seq, input_dim), dtype=jnp.float32)

    # Deterministic param init mimicking torch.nn.Linear (uniform +-1/sqrt(fan_in)).
    bound_enc = 1.0 / jnp.sqrt(jnp.float32(input_dim))
    w_enc = jax.random.uniform(kw1, (input_dim, hidden_dim), jnp.float32,
                               -bound_enc, bound_enc)
    b_enc = jax.random.uniform(kb1, (hidden_dim,), jnp.float32,
                               -bound_enc, bound_enc)
    bound_dec = 1.0 / jnp.sqrt(jnp.float32(hidden_dim))
    w_dec = jax.random.uniform(kw2, (hidden_dim, input_dim), jnp.float32,
                               -bound_dec, bound_dec)

    sparse_feats, recon = sparse_autoencoder_forward(x, w_enc, b_enc, w_dec, k=k)
    jax.block_until_ready((sparse_feats, recon))

    # Correctness check against a pure-JAX reference.
    ref_sparse, ref_recon = _reference_forward(x, w_enc, b_enc, w_dec, k)
    assert jnp.allclose(sparse_feats, ref_sparse, atol=1e-5), "sparse features mismatch"
    assert jnp.allclose(recon, ref_recon, atol=1e-5), "reconstruction mismatch"

    print("KERNEL_OK")
</pallas_src>

<mosaic_0001>
module attributes {stable_mosaic.version = 11 : i64} {
  func.func @_sae_kernel(%arg0: i32, %arg1: memref<16x128xf32, #tpu.memory_space<vmem>>, %arg2: memref<128x128xf32, #tpu.memory_space<vmem>>, %arg3: memref<1x128xf32, #tpu.memory_space<vmem>>, %arg4: memref<128x128xf32, #tpu.memory_space<vmem>>, %arg5: memref<16x128xf32, #tpu.memory_space<vmem>>, %arg6: memref<16x128xf32, #tpu.memory_space<vmem>>) attributes {dimension_semantics = [#tpu.dimension_semantics<parallel>], iteration_bounds = array<i64: 1>, scalar_prefetch = 0 : i64, scratch_operands = 0 : i64, tpu.core_type = #tpu.core_type<tc>, window_params = [{transform_indices = @transform_0, window_bounds = array<i64: 16, 128>}, {pipeline_mode = #tpu.pipeline_mode<synchronous>, transform_indices = @transform_1, window_bounds = array<i64: 128, 128>}, {pipeline_mode = #tpu.pipeline_mode<synchronous>, transform_indices = @transform_2, window_bounds = array<i64: 1, 128>}, {pipeline_mode = #tpu.pipeline_mode<synchronous>, transform_indices = @transform_3, window_bounds = array<i64: 128, 128>}, {transform_indices = @transform_4, window_bounds = array<i64: 16, 128>}, {transform_indices = @transform_5, window_bounds = array<i64: 16, 128>}]} {
    %c0 = arith.constant 0 : index
    %c0_0 = arith.constant 0 : index
    %0 = vector.load %arg1[%c0, %c0_0] : memref<16x128xf32, #tpu.memory_space<vmem>>, vector<16x128xf32>
    %c0_1 = arith.constant 0 : index
    %c0_2 = arith.constant 0 : index
    %1 = vector.load %arg2[%c0_1, %c0_2] : memref<128x128xf32, #tpu.memory_space<vmem>>, vector<128x128xf32>
    %cst = arith.constant dense<0.000000e+00> : vector<16x128xf32>
    %2 = tpu.matmul %0, %1, %cst {dimension_numbers = #tpu.dot_dimension_numbers<[1], [0], [0], [1], [0, 0, 1, 1], [], []>} : vector<16x128xf32>, vector<128x128xf32>, vector<16x128xf32> -> vector<16x128xf32>
    %c0_3 = arith.constant 0 : index
    %c0_4 = arith.constant 0 : index
    %3 = vector.load %arg3[%c0_3, %c0_4] : memref<1x128xf32, #tpu.memory_space<vmem>>, vector<1x128xf32>
    %4 = vector.broadcast %3 : vector<1x128xf32> to vector<16x128xf32>
    %5 = arith.addf %2, %4 : vector<16x128xf32>
    %cst_5 = arith.constant 0.000000e+00 : f32
    %6 = vector.broadcast %cst_5 : f32 to vector<16x128xf32>
    %7 = arith.maximumf %5, %6 : vector<16x128xf32>
    %8 = tpu.bitcast %7 : vector<16x128xf32> -> vector<16x128xi32>
    %c0_i32 = arith.constant 0 : i32
    %9 = vector.broadcast %c0_i32 : i32 to vector<16x1xi32>
    %c2139095039_i32 = arith.constant 2139095039 : i32
    %10 = vector.broadcast %c2139095039_i32 : i32 to vector<16x1xi32>
    %c0_i32_6 = arith.constant 0 : i32
    %c31_i32 = arith.constant 31 : i32
    %11 = arith.addi %c0_i32_6, %c31_i32 : i32
    %c1_i32 = arith.constant 1 : i32
    %12:2 = scf.for %arg7 = %c0_i32_6 to %11 step %c1_i32 iter_args(%arg8 = %9, %arg9 = %10) -> (vector<16x1xi32>, vector<16x1xi32>)  : i32 {
      %21 = arith.subi %arg9, %arg8 : vector<16x1xi32>
      %c1_i32_15 = arith.constant 1 : i32
      %22 = vector.broadcast %c1_i32_15 : i32 to vector<16x1xi32>
      %23 = arith.addi %21, %22 : vector<16x1xi32>
      %c1_i32_16 = arith.constant 1 : i32
      %24 = vector.broadcast %c1_i32_16 : i32 to vector<16x1xi32>
      %25 = arith.shrsi %23, %24 : vector<16x1xi32>
      %26 = arith.addi %arg8, %25 : vector<16x1xi32>
      %27 = vector.broadcast %26 : vector<16x1xi32> to vector<16x128xi32>
      %28 = arith.cmpi sge, %8, %27 : vector<16x128xi32>
      %29 = arith.extui %28 : vector<16x128xi1> to vector<16x128xi32>
      %30 = arith.sitofp %29 : vector<16x128xi32> to vector<16x128xf32>
      %cst_17 = arith.constant dense<0.000000e+00> : vector<16xf32>
      %31 = vector.multi_reduction <add>, %30, %cst_17 [1] : vector<16x128xf32> to vector<16xf32>
      %32 = vector.shape_cast %31 : vector<16xf32> to vector<16x1xf32>
      %cst_18 = arith.constant 8.000000e+00 : f32
      %33 = vector.broadcast %cst_18 : f32 to vector<16x1xf32>
      %34 = arith.cmpf oge, %32, %33 : vector<16x1xf32>
      %35 = arith.select %34, %26, %arg8 : vector<16x1xi1>, vector<16x1xi32>
      %c1_i32_19 = arith.constant 1 : i32
      %36 = vector.broadcast %c1_i32_19 : i32 to vector<16x1xi32>
      %37 = arith.subi %26, %36 : vector<16x1xi32>
      %38 = arith.select %34, %arg9, %37 : vector<16x1xi1>, vector<16x1xi32>
      scf.yield %35, %38 : vector<16x1xi32>, vector<16x1xi32>
    }
    %13 = vector.broadcast %12#0 : vector<16x1xi32> to vector<16x128xi32>
    %14 = arith.cmpi sge, %8, %13 : vector<16x128xi32>
    %cst_7 = arith.constant 0.000000e+00 : f32
    %15 = vector.broadcast %cst_7 : f32 to vector<16x128xf32>
    %16 = arith.select %14, %7, %15 : vector<16x128xi1>, vector<16x128xf32>
    %c0_8 = arith.constant 0 : index
    %c0_9 = arith.constant 0 : index
    %17 = vector.load %arg4[%c0_8, %c0_9] : memref<128x128xf32, #tpu.memory_space<vmem>>, vector<128x128xf32>
    %cst_10 = arith.constant dense<0.000000e+00> : vector<16x128xf32>
    %18 = tpu.matmul %16, %17, %cst_10 {dimension_numbers = #tpu.dot_dimension_numbers<[1], [0], [0], [1], [0, 0, 1, 1], [], []>} : vector<16x128xf32>, vector<128x128xf32>, vector<16x128xf32> -> vector<16x128xf32>
    %c0_11 = arith.constant 0 : index
    %c0_12 = arith.constant 0 : index
    %19 = vector.load %arg5[%c0_11, %c0_12] : memref<16x128xf32, #tpu.memory_space<vmem>>, vector<16x128xf32>
    tpu.vector_store %arg5[%c0_11, %c0_12], %16 {strides = array<i32>} : memref<16x128xf32, #tpu.memory_space<vmem>>, vector<16x128xf32>,
    %c0_13 = arith.constant 0 : index
    %c0_14 = arith.constant 0 : index
    %20 = vector.load %arg6[%c0_13, %c0_14] : memref<16x128xf32, #tpu.memory_space<vmem>>, vector<16x128xf32>
    tpu.vector_store %arg6[%c0_13, %c0_14], %18 {strides = array<i32>} : memref<16x128xf32, #tpu.memory_space<vmem>>, vector<16x128xf32>,
    return
  }
  func.func @transform_0(%arg0: i32) -> (i32, i32) {
    %c0_i32 = arith.constant 0 : i32
    %c0_i32_0 = arith.constant 0 : i32
    return %arg0, %c0_i32 : i32, i32
  }
  func.func @transform_1(%arg0: i32) -> (i32, i32) {
    %c0_i32 = arith.constant 0 : i32
    %c0_i32_0 = arith.constant 0 : i32
    %c0_i32_1 = arith.constant 0 : i32
    return %c0_i32, %c0_i32_0 : i32, i32
  }
  func.func @transform_2(%arg0: i32) -> (i32, i32) {
    %c0_i32 = arith.constant 0 : i32
    %c0_i32_0 = arith.constant 0 : i32
    %c0_i32_1 = arith.constant 0 : i32
    return %c0_i32, %c0_i32_0 : i32, i32
  }
  func.func @transform_3(%arg0: i32) -> (i32, i32) {
    %c0_i32 = arith.constant 0 : i32
    %c0_i32_0 = arith.constant 0 : i32
    %c0_i32_1 = arith.constant 0 : i32
    return %c0_i32, %c0_i32_0 : i32, i32
  }
  func.func @transform_4(%arg0: i32) -> (i32, i32) {
    %c0_i32 = arith.constant 0 : i32
    %c0_i32_0 = arith.constant 0 : i32
    return %arg0, %c0_i32 : i32, i32
  }
  func.func @transform_5(%arg0: i32) -> (i32, i32) {
    %c0_i32 = arith.constant 0 : i32
    %c0_i32_0 = arith.constant 0 : i32
    return %arg0, %c0_i32 : i32, i32
  }
}

</mosaic_0001>

<llo_original>
// kernel: tpu_custom_call.1
$region0: #{tpu_custom_call.1}
  #allocation0 [shape = 'u32[]', space=smem, size = 0x4, offset = 0x4, fixed_abs, tag = 'smem constant byte address 0x4 - core index']
  #allocation1 [shape = 'u32[144,128]{1,0:T(1,128)}', space=vmem, size = 0x12000, scoped, tag = 'internal scratch']
  %s0 = inlined_call_operand.hbm [shape: f32[16,128], index: 0, kind: input, shape index: {}]
  %s1 = inlined_call_operand.hbm [shape: f32[128,128], index: 1, kind: input, shape index: {}]
  %s2 = inlined_call_operand.vmem [shape: f32[1,128], index: 2, kind: input, shape index: {}]
  %s3 = inlined_call_operand.hbm [shape: f32[128,128], index: 3, kind: input, shape index: {}]
  %s4 = inlined_call_operand.hbm [shape: f32[16,128], index: 4, kind: output, shape index: {0}]
  %s5 = inlined_call_operand.hbm [shape: f32[16,128], index: 5, kind: output, shape index: {1}]
  %6 = xla_tuple %s4, %s5
  %s7 = sld [smem:[#allocation0]]
  $region53: #{tpu_custom_call.1} parent=0
    _
  %s9 = ssub.s32 1, %s7
  %s10 = scalar_select 0, %s9, %s7
  $region1: #{tpu_custom_call.1} parent=0
    #allocation2 [shape = 'u8[8192]{0}', space=vmem, size = 0x2000, scoped, tag = 'input window, operand 0, single buffered']
    #allocation3 [shape = 's32[1]{0}', space=sflag, size = 0x4, scoped, tag = 'scoped memory for tpu_custom_call.1']
    #allocation4 [shape = 's32[1]{0}', space=sflag, size = 0x4, scoped, tag = 'scoped memory for tpu_custom_call.1']
    #allocation5 [shape = 'u8[65536]{0}', space=vmem, size = 0x10000, scoped, tag = 'input window, operand 1, single buffered']
    #allocation6 [shape = 's32[1]{0}', space=sflag, size = 0x4, scoped, tag = 'scoped memory for tpu_custom_call.1']
    #allocation7 [shape = 'u8[65536]{0}', space=vmem, size = 0x10000, scoped, tag = 'input window, operand 3, single buffered']
    #allocation8 [shape = 'u8[8192]{0}', space=vmem, size = 0x2000, scoped, tag = 'output window, operand 0, single buffered']
    #allocation9 [shape = 'u8[8192]{0}', space=vmem, size = 0x2000, scoped, tag = 'output window, operand 1, single buffered']
    #allocation10 [shape = 's32[1]{0}', space=sflag, size = 0x4, scoped, tag = 'scoped memory for tpu_custom_call.1']
    %11 = vsyncpa [#allocation3], 0
    %12 = vsyncpa [#allocation6], 0
    %13 = vsyncpa [#allocation4], 0
    %14 = vsyncpa [#allocation10], 0
    // Predicated region
    $region2: #{tpu_custom_call.1} parent=1 // pred_check
      _
    $region3: #{tpu_custom_call.1} parent=1 // pred_check_branch
      %16 = sbr.rel (0) target = $region5
    $region4: #{tpu_custom_call.1} parent=1 // pred_region
      %s18 = ssub.s32 256, 256
      %19 = vsyncadd [#allocation3], %s18
      %s20 = sshll.u32 [#allocation2], 4
      %s21 = int_to_ptr.vmem [resolvable:$true] %s20
      %26 = dma.hbm_to_vmem [thread:$0]  %s0, 256, %s21, [#allocation3], 128, 128, 8
    $region5: #{tpu_custom_call.1} parent=1 // pred_fallthru
      _
    // Predicated region
    $region6: #{tpu_custom_call.1} parent=1 // pred_check
      _
    $region7: #{tpu_custom_call.1} parent=1 // pred_check_branch
      %28 = sbr.rel (0) target = $region9
    $region8: #{tpu_custom_call.1} parent=1 // pred_region
      %s30 = ssub.s32 2048, 2048
      %31 = vsyncadd [#allocation6], %s30
      %s32 = sshll.u32 [#allocation5], 4
      %s33 = int_to_ptr.vmem [resolvable:$true] %s32
      %38 = dma.hbm_to_vmem [thread:$0]  %s1, 2048, %s33, [#allocation6], 128, 128, 8
    $region9: #{tpu_custom_call.1} parent=1 // pred_fallthru
      _
    // Predicated region
    $region10: #{tpu_custom_call.1} parent=1 // pred_check
      _
    $region11: #{tpu_custom_call.1} parent=1 // pred_check_branch
      %40 = sbr.rel (0) target = $region13
    $region12: #{tpu_custom_call.1} parent=1 // pred_region
      _
    $region13: #{tpu_custom_call.1} parent=1 // pred_fallthru
      _
    // Predicated region
    $region14: #{tpu_custom_call.1} parent=1 // pred_check
      _
    $region15: #{tpu_custom_call.1} parent=1 // pred_check_branch
      %42 = sbr.rel (0) target = $region17
    $region16: #{tpu_custom_call.1} parent=1 // pred_region
      %s44 = ssub.s32 2048, 2048
      %45 = vsyncadd [#allocation6], %s44
      %s46 = sshll.u32 [#allocation7], 4
      %s47 = int_to_ptr.vmem [resolvable:$true] %s46
      %52 = dma.hbm_to_vmem [thread:$0]  %s3, 2048, %s47, [#allocation6], 128, 128, 8
    $region17: #{tpu_custom_call.1} parent=1 // pred_fallthru
      _
    // Predicated region
    $region18: #{tpu_custom_call.1} parent=1 // pred_check
      _
    $region19: #{tpu_custom_call.1} parent=1 // pred_check_branch
      %54 = sbr.rel (0) target = $region21
    $region20: #{tpu_custom_call.1} parent=1 // pred_region
      %55 = dma.done [#allocation3], 256
    $region21: #{tpu_custom_call.1} parent=1 // pred_fallthru
      _
    // Predicated region
    $region22: #{tpu_custom_call.1} parent=1 // pred_check
      _
    $region23: #{tpu_custom_call.1} parent=1 // pred_check_branch
      %57 = sbr.rel (0) target = $region25
    $region24: #{tpu_custom_call.1} parent=1 // pred_region
      %58 = dma.done [#allocation6], 2048
    $region25: #{tpu_custom_call.1} parent=1 // pred_fallthru
      _
    // Predicated region
    $region26: #{tpu_custom_call.1} parent=1 // pred_check
      _
    $region27: #{tpu_custom_call.1} parent=1 // pred_check_branch
      %60 = sbr.rel (0) target = $region29
    $region28: #{tpu_custom_call.1} parent=1 // pred_region
      %61 = dma.done [#allocation6], 2048
    $region29: #{tpu_custom_call.1} parent=1 // pred_fallthru
      _
    %v62 = vld [vmem:[#allocation2] sm:$0xff]
    %v63 = vld [vmem:[#allocation2 + $0x8] sm:$0xff]
    %v64 = vld [vmem:[#allocation5] sm:$0xff]
    %v65 = vld [vmem:[#allocation5 + $0x8] sm:$0xff]
    %v66 = vld [vmem:[#allocation5 + $0x10] sm:$0xff]
    %v67 = vld [vmem:[#allocation5 + $0x18] sm:$0xff]
    %v68 = vld [vmem:[#allocation5 + $0x20] sm:$0xff]
    %v69 = vld [vmem:[#allocation5 + $0x28] sm:$0xff]
    %v70 = vld [vmem:[#allocation5 + $0x30] sm:$0xff]
    %v71 = vld [vmem:[#allocation5 + $0x38] sm:$0xff]
    %v72 = vld [vmem:[#allocation5 + $0x40] sm:$0xff]
    %v73 = vld [vmem:[#allocation5 + $0x48] sm:$0xff]
    %v74 = vld [vmem:[#allocation5 + $0x50] sm:$0xff]
    %v75 = vld [vmem:[#allocation5 + $0x58] sm:$0xff]
    %v76 = vld [vmem:[#allocation5 + $0x60] sm:$0xff]
    %v77 = vld [vmem:[#allocation5 + $0x68] sm:$0xff]
    %v78 = vld [vmem:[#allocation5 + $0x70] sm:$0xff]
    %v79 = vld [vmem:[#allocation5 + $0x78] sm:$0xff]
    %v80 = vld [vmem:[%s2] sm:$0x1]
    %v82 = vlaneseq
    %v83 = vshrl.u32 %v82, 7
    %v84 = vsub.s32 0, %v83
    %v85 = vrot.slane %v80, %v84
    %87 = vmatprep.subr.mxu0 0.0
    %88 = vmatpush1.msra.mxu0 %v79
    %89 = vmatprep.subr.mxu0 0.0
    %90 = vmatpush1.msra.mxu0 %v78
    %91 = vmatprep.subr.mxu0 0.0
    %92 = vmatpush1.msra.mxu0 %v77
    %93 = vmatprep.subr.mxu0 0.0
    %94 = vmatpush1.msra.mxu0 %v76
    %95 = vmatprep.subr.mxu0 0.0
    %96 = vmatpush1.msra.mxu0 %v75
    %97 = vmatprep.subr.mxu0 0.0
    %98 = vmatpush1.msra.mxu0 %v74
    %99 = vmatprep.subr.mxu0 0.0
    %100 = vmatpush1.msra.mxu0 %v73
    %101 = vmatprep.subr.mxu0 0.0
    %102 = vmatpush1.msra.mxu0 %v72
    %103 = vmatprep.subr.mxu0 0.0
    %104 = vmatpush1.msra.mxu0 %v71
    %105 = vmatprep.subr.mxu0 0.0
    %106 = vmatpush1.msra.mxu0 %v70
    %107 = vmatprep.subr.mxu0 0.0
    %108 = vmatpush1.msra.mxu0 %v69
    %109 = vmatprep.subr.mxu0 0.0
    %110 = vmatpush1.msra.mxu0 %v68
    %111 = vmatprep.subr.mxu0 0.0
    %112 = vmatpush1.msra.mxu0 %v67
    %113 = vmatprep.subr.mxu0 0.0
    %114 = vmatpush1.msra.mxu0 %v66
    %115 = vmatprep.subr.mxu0 0.0
    %116 = vmatpush1.msra.mxu0 %v65
    %117 = vmatprep.subr.mxu0 0.0
    %118 = vmatpush1.msra.mxu0 %v64
    %119 = vmatprep.subr.mxu0 0.0
    %120 = vmatpush2.msra.mxu0 0.0
    %121 = vmatprep.subr.mxu0 0.0
    %122 = vmatpush2.msra.mxu0 0.0
    %123 = vmatprep.subr.mxu0 0.0
    %124 = vmatpush2.msra.mxu0 0.0
    %125 = vmatprep.subr.mxu0 0.0
    %126 = vmatpush2.msra.mxu0 0.0
    %127 = vmatprep.subr.mxu0 0.0
    %128 = vmatpush2.msra.mxu0 0.0
    %129 = vmatprep.subr.mxu0 0.0
    %130 = vmatpush2.msra.mxu0 0.0
    %131 = vmatprep.subr.mxu0 0.0
    %132 = vmatpush2.msra.mxu0 0.0
    %133 = vmatprep.subr.mxu0 0.0
    %134 = vmatpush2.msra.mxu0 0.0
    %135 = vmatprep.subr.mxu0 0.0
    %136 = vmatpush2.msra.mxu0 0.0
    %137 = vmatprep.subr.mxu0 0.0
    %138 = vmatpush2.msra.mxu0 0.0
    %139 = vmatprep.subr.mxu0 0.0
    %140 = vmatpush2.msra.mxu0 0.0
    %141 = vmatprep.subr.mxu0 0.0
    %142 = vmatpush2.msra.mxu0 0.0
    %143 = vmatprep.subr.mxu0 0.0
    %144 = vmatpush2.msra.mxu0 0.0
    %145 = vmatprep.subr.mxu0 0.0
    %146 = vmatpush2.msra.mxu0 0.0
    %147 = vmatprep.subr.mxu0 0.0
    %148 = vmatpush2.msra.mxu0 0.0
    %149 = vmatprep.subr.mxu0 0.0
    %150 = vmatpush2.msra.mxu0 0.0
    %151 = vmatprep.mubr.f32.mxu0 0.0
    %152 = vmatmul.mubr.f32.gmra.mxu0 %v62
    %v153 = vpop.f32.mrf.mxu0
    %v154 = vadd.f32 %v85, %v153
    %v155 = vpop.f32.mrf.mxu0
    %156 = vmatprep.mubr.f32.mxu0 0.0
    %157 = vmatmul.mubr.f32.gmra.mxu0 %v63
    %v158 = vpop.f32.mrf.mxu0
    %v159 = vadd.f32 %v85, %v158
    %v160 = vpop.f32.mrf.mxu0
    %161 = vdwg.mxu0
    %v162 = vmax.f32 %v154, 0.0
    %v163 = vmax.f32 %v159, 0.0
    loop: start=0, step=1, limit=31
    $region30: #{tpu_custom_call.1} parent=1 // loop_pre_header
      _
    $region31: #{tpu_custom_call.1} parent=1 // loop_header
      %s167 = sphi 0, %s171
      %p168 = scmp.ge.s32.totalorder %s167, 31
      %v172 = vphi 0, %v196
      %v173 = vphi 0, %v197
      %v174 = vphi 2139095039, %v200
      %v175 = vphi 2139095039, %v201
    $region32: #{tpu_custom_call.1} parent=1 // loop_header_branch
      %170 = sbr.rel (%p168) target = $region36
    $region33: #{tpu_custom_call.1} parent=1 // loop_body
      %v176 = vsub.s32 %v174, %v172
      %v177 = vsub.s32 %v175, %v173
      %v178 = vadd.s32 %v176, 1
      %v179 = vadd.s32 %v177, 1
      %v180 = vshra.s32 %v178, 1
      %v181 = vshra.s32 %v179, 1
      %v182 = vadd.s32 %v172, %v180
      %v183 = vadd.s32 %v173, %v181
      %vm184 = vcmp.ge.s32.totalorder %v162, %v182
      %vm185 = vcmp.ge.s32.totalorder %v163, %v183
      %v186 = vsel %vm184, 1, 0
      %v187 = vsel %vm185, 1, 0
      %v188 = vcvt.s32.f32 %v186
      %v189 = vcvt.s32.f32 %v187
      %190 = vadd.xlane.f32.xlu0 %v188
      %v191 = vpop.xlane.xlu0 %190
      %192 = vadd.xlane.f32.xlu0 %v189
      %v193 = vpop.xlane.xlu0 %192
      %vm194 = vcmp.ge.f32.partialorder %v191, 8.0
      %vm195 = vcmp.ge.f32.partialorder %v193, 8.0
      %v196 = vsel %vm194, %v182, %v172
      %v197 = vsel %vm195, %v183, %v173
      %v198 = vsub.s32 %v182, 1
      %v199 = vsub.s32 %v183, 1
      %v200 = vsel %vm194, %v174, %v198
      %v201 = vsel %vm195, %v175, %v199
    $region34: #{tpu_custom_call.1} parent=1 // loop_footer
      %s171 = sadd.s32 1, %s167
    $region35: #{tpu_custom_call.1} parent=1 // loop_footer_branch
      %166 = sbr.rel target = $region31
    $region36: #{tpu_custom_call.1} parent=1 // loop_exit
      _
    %vm202 = vcmp.ge.s32.totalorder %v162, %v172
    %vm203 = vcmp.ge.s32.totalorder %v163, %v173
    %v204 = vsel %vm202, %v162, 0.0
    %v205 = vsel %vm203, %v163, 0.0
    %v206 = vld [vmem:[#allocation7] sm:$0xff]
    %v207 = vld [vmem:[#allocation7 + $0x8] sm:$0xff]
    %v208 = vld [vmem:[#allocation7 + $0x10] sm:$0xff]
    %v209 = vld [vmem:[#allocation7 + $0x18] sm:$0xff]
    %v210 = vld [vmem:[#allocation7 + $0x20] sm:$0xff]
    %v211 = vld [vmem:[#allocation7 + $0x28] sm:$0xff]
    %v212 = vld [vmem:[#allocation7 + $0x30] sm:$0xff]
    %v213 = vld [vmem:[#allocation7 + $0x38] sm:$0xff]
    %v214 = vld [vmem:[#allocation7 + $0x40] sm:$0xff]
    %v215 = vld [vmem:[#allocation7 + $0x48] sm:$0xff]
    %v216 = vld [vmem:[#allocation7 + $0x50] sm:$0xff]
    %v217 = vld [vmem:[#allocation7 + $0x58] sm:$0xff]
    %v218 = vld [vmem:[#allocation7 + $0x60] sm:$0xff]
    %v219 = vld [vmem:[#allocation7 + $0x68] sm:$0xff]
    %v220 = vld [vmem:[#allocation7 + $0x70] sm:$0xff]
    %v221 = vld [vmem:[#allocation7 + $0x78] sm:$0xff]
    %222 = vmatprep.subr.mxu0 0.0
    %223 = vmatpush1.msra.mxu0 %v221
    %224 = vmatprep.subr.mxu0 0.0
    %225 = vmatpush1.msra.mxu0 %v220
    %226 = vmatprep.subr.mxu0 0.0
    %227 = vmatpush1.msra.mxu0 %v219
    %228 = vmatprep.subr.mxu0 0.0
    %229 = vmatpush1.msra.mxu0 %v218
    %230 = vmatprep.subr.mxu0 0.0
    %231 = vmatpush1.msra.mxu0 %v217
    %232 = vmatprep.subr.mxu0 0.0
    %233 = vmatpush1.msra.mxu0 %v216
    %234 = vmatprep.subr.mxu0 0.0
    %235 = vmatpush1.msra.mxu0 %v215
    %236 = vmatprep.subr.mxu0 0.0
    %237 = vmatpush1.msra.mxu0 %v214
    %238 = vmatprep.subr.mxu0 0.0
    %239 = vmatpush1.msra.mxu0 %v213
    %240 = vmatprep.subr.mxu0 0.0
    %241 = vmatpush1.msra.mxu0 %v212
    %242 = vmatprep.subr.mxu0 0.0
    %243 = vmatpush1.msra.mxu0 %v211
    %244 = vmatprep.subr.mxu0 0.0
    %245 = vmatpush1.msra.mxu0 %v210
    %246 = vmatprep.subr.mxu0 0.0
    %247 = vmatpush1.msra.mxu0 %v209
    %248 = vmatprep.subr.mxu0 0.0
    %249 = vmatpush1.msra.mxu0 %v208
    %250 = vmatprep.subr.mxu0 0.0
    %251 = vmatpush1.msra.mxu0 %v207
    %252 = vmatprep.subr.mxu0 0.0
    %253 = vmatpush1.msra.mxu0 %v206
    %254 = vmatprep.subr.mxu0 0.0
    %255 = vmatpush2.msra.mxu0 0.0
    %256 = vmatprep.subr.mxu0 0.0
    %257 = vmatpush2.msra.mxu0 0.0
    %258 = vmatprep.subr.mxu0 0.0
    %259 = vmatpush2.msra.mxu0 0.0
    %260 = vmatprep.subr.mxu0 0.0
    %261 = vmatpush2.msra.mxu0 0.0
    %262 = vmatprep.subr.mxu0 0.0
    %263 = vmatpush2.msra.mxu0 0.0
    %264 = vmatprep.subr.mxu0 0.0
    %265 = vmatpush2.msra.mxu0 0.0
    %266 = vmatprep.subr.mxu0 0.0
    %267 = vmatpush2.msra.mxu0 0.0
    %268 = vmatprep.subr.mxu0 0.0
    %269 = vmatpush2.msra.mxu0 0.0
    %270 = vmatprep.subr.mxu0 0.0
    %271 = vmatpush2.msra.mxu0 0.0
    %272 = vmatprep.subr.mxu0 0.0
    %273 = vmatpush2.msra.mxu0 0.0
    %274 = vmatprep.subr.mxu0 0.0
    %275 = vmatpush2.msra.mxu0 0.0
    %276 = vmatprep.subr.mxu0 0.0
    %277 = vmatpush2.msra.mxu0 0.0
    %278 = vmatprep.subr.mxu0 0.0
    %279 = vmatpush2.msra.mxu0 0.0
    %280 = vmatprep.subr.mxu0 0.0
    %281 = vmatpush2.msra.mxu0 0.0
    %282 = vmatprep.subr.mxu0 0.0
    %283 = vmatpush2.msra.mxu0 0.0
    %284 = vmatprep.subr.mxu0 0.0
    %285 = vmatpush2.msra.mxu0 0.0
    %286 = vmatprep.mubr.f32.mxu0 0.0
    %287 = vmatmul.mubr.f32.gmra.mxu0 %v204
    %v288 = vpop.f32.mrf.mxu0
    %v289 = vadd.f32 0.0, %v288
    %v290 = vpop.f32.mrf.mxu0
    %291 = vmatprep.mubr.f32.mxu0 0.0
    %292 = vmatmul.mubr.f32.gmra.mxu0 %v205
    %v293 = vpop.f32.mrf.mxu0
    %v294 = vadd.f32 0.0, %v293
    %v295 = vpop.f32.mrf.mxu0
    %296 = vdwg.mxu0
    %297 = vst [vmem:[#allocation8] sm:$0xff] %v204
    %298 = vst [vmem:[#allocation8 + $0x8] sm:$0xff] %v205
    %299 = vst [vmem:[#allocation9] sm:$0xff] %v289
    %300 = vst [vmem:[#allocation9 + $0x8] sm:$0xff] %v294
    // Predicated region
    $region37: #{tpu_custom_call.1} parent=1 // pred_check
      _
    $region38: #{tpu_custom_call.1} parent=1 // pred_check_branch
      %302 = sbr.rel (0) target = $region40
    $region39: #{tpu_custom_call.1} parent=1 // pred_region
      %s304 = ssub.s32 256, 256
      %305 = vsyncadd [#allocation4], %s304
      %s306 = sshll.u32 [#allocation8], 4
      %s307 = int_to_ptr.vmem [resolvable:$true] %s306
      %312 = dma.vmem_to_hbm [thread:$0]  %s307, 256, %s4, [#allocation4], 128, 128, 8
    $region40: #{tpu_custom_call.1} parent=1 // pred_fallthru
      _
    // Predicated region
    $region41: #{tpu_custom_call.1} parent=1 // pred_check
      _
    $region42: #{tpu_custom_call.1} parent=1 // pred_check_branch
      %314 = sbr.rel (0) target = $region44
    $region43: #{tpu_custom_call.1} parent=1 // pred_region
      %s316 = ssub.s32 256, 256
      %317 = vsyncadd [#allocation10], %s316
      %s318 = sshll.u32 [#allocation9], 4
      %s319 = int_to_ptr.vmem [resolvable:$true] %s318
      %324 = dma.vmem_to_hbm [thread:$0]  %s319, 256, %s5, [#allocation10], 128, 128, 8
    $region44: #{tpu_custom_call.1} parent=1 // pred_fallthru
      _
    // Predicated region
    $region45: #{tpu_custom_call.1} parent=1 // pred_check
      _
    $region46: #{tpu_custom_call.1} parent=1 // pred_check_branch
      %326 = sbr.rel (0) target = $region48
    $region47: #{tpu_custom_call.1} parent=1 // pred_region
      %327 = dma.done [#allocation4], 256
    $region48: #{tpu_custom_call.1} parent=1 // pred_fallthru
      _
    // Predicated region
    $region49: #{tpu_custom_call.1} parent=1 // pred_check
      _
    $region50: #{tpu_custom_call.1} parent=1 // pred_check_branch
      %329 = sbr.rel (0) target = $region52
    $region51: #{tpu_custom_call.1} parent=1 // pred_region
      %330 = dma.done [#allocation10], 256
    $region52: #{tpu_custom_call.1} parent=1 // pred_fallthru
      _
    %331 = vsyncpa [#allocation3], 1
    %332 = vsyncpa [#allocation6], 1
    %333 = vsyncpa [#allocation4], 1
    %334 = vsyncpa [#allocation10], 1

</llo_original>
